<compile_context>
chip_gen: v7x
topology: tpu7x:2x2x1
jax: 0.10.0
libtpu: 0.0.40
codegen_flags: <defaults>
</compile_context>

<pallas_src>
import jax
import jax.numpy as jnp
from jax.experimental import pallas as pl
from jax.experimental.pallas import tpu as pltpu

_HIDDEN = 32


def _mlp_kernel(x_ref, w1_ref, b1_ref, w2_ref, b2_ref, wh_ref, bh_ref, out_ref):
    # x_ref: (num_params, Bt) bf16 ; weights bf16 (out, in) ; biases f32 (out, 1)
    x = x_ref[...]

    # hidden layer 1: Linear(num_params, 32) + ReLU    -> (32, Bt) f32
    h1 = jnp.dot(w1_ref[...], x, preferred_element_type=jnp.float32)
    h1 = jnp.maximum(h1 + b1_ref[...], 0.0)

    # hidden layer 2: Linear(32, 32) + ReLU            -> (32, Bt) f32
    h2 = jnp.dot(w2_ref[...], h1.astype(jnp.bfloat16),
                 preferred_element_type=jnp.float32)
    h2 = jnp.maximum(h2 + b2_ref[...], 0.0)

    # fused heads: rows [0:num_params] = regression, row [num_params] = class.
    heads = jnp.dot(wh_ref[...], h2.astype(jnp.bfloat16),
                    preferred_element_type=jnp.float32) + bh_ref[...]

    out_ref[...] = heads.astype(out_ref.dtype)


def _select_batch_tile(B, block_b):
    """Pick the batch tile size.

    * multiple of 128 (or == B when B is a single small tile),
    * capped at block_b,
    * guarantees >= 2 grid steps when B >= 256 so both v7x TensorCores work.
    """
    assert block_b % 128 == 0, "block_b must be a multiple of 128"
    if B < 256:
        return B                       # single block == full dim (always legal)
    half_up = ((-(-B // 2)) + 127) // 128 * 128   # round_up(ceil(B/2), 128)
    return min(block_b, half_up)


def noise_classifier_regressor(x, kernel_params, *, block_b=32768,
                               x_transposed=False, out_dtype=jnp.float32,
                               return_transposed=False):
    """Forward pass.

    x: (B, num_params) f32, or (num_params, B) bf16 if x_transposed=True.
    kernel_params: output of prepare_kernel_params().
    Returns (class_out, reg_out):
      * batch-major (default): (B, 1) and (B, num_params)
      * return_transposed=True: (1, B) and (num_params, B)  (no wrapper transpose)
    """
    w1, b1, w2, b2, wh, bh = kernel_params

    if x_transposed:
        num_params, B = x.shape
        xt = x.astype(jnp.bfloat16)
    else:
        B, num_params = x.shape
        xt = x.T.astype(jnp.bfloat16)          # (num_params, B)

    n_heads = num_params + 1
    assert wh.shape == (n_heads, _HIDDEN)

    bt = _select_batch_tile(B, block_b)
    nb = pl.cdiv(B, bt)

    pinned = lambda i: (0, 0)       # weights/biases stay VMEM-resident
    tiled = lambda i: (0, i)        # batch-tiled arrays

    grid_spec = pltpu.PrefetchScalarGridSpec(
        num_scalar_prefetch=0,
        grid=(nb,),
        in_specs=[
            pl.BlockSpec((num_params, bt), tiled),        # x (transposed)
            pl.BlockSpec((_HIDDEN, num_params), pinned),  # w1
            pl.BlockSpec((_HIDDEN, 1), pinned),           # b1
            pl.BlockSpec((_HIDDEN, _HIDDEN), pinned),     # w2
            pl.BlockSpec((_HIDDEN, 1), pinned),           # b2
            pl.BlockSpec((n_heads, _HIDDEN), pinned),     # fused head weight
            pl.BlockSpec((n_heads, 1), pinned),           # fused head bias
        ],
        out_specs=pl.BlockSpec((n_heads, bt), tiled),     # fused heads output
    )

    cp_kwargs = dict(dimension_semantics=("parallel",))
    if bt > 32768:
        # Big tiles overflow the scoped-VMEM default; avoid on v7x (64 MiB VMEM).
        cp_kwargs["vmem_limit_bytes"] = 100 * 1024 * 1024

    fused_t = pl.pallas_call(
        _mlp_kernel,
        out_shape=jax.ShapeDtypeStruct((n_heads, B), out_dtype),
        grid_spec=grid_spec,
        compiler_params=pltpu.CompilerParams(**cp_kwargs),
    )(xt, w1, b1, w2, b2, wh, bh)

    if return_transposed:
        return fused_t[num_params:, :], fused_t[:num_params, :]

    fused = fused_t.T                                   # single XLA transpose
    return fused[:, num_params:], fused[:, :num_params]


def init_params(key, num_params, dtype=jnp.float32):
    """PyTorch-style Linear init: weights (out, in), biases (out,), U(+/- 1/sqrt(fan_in))."""
    def linear(key, fan_in, fan_out):
        kw, kb = jax.random.split(key)
        bound = 1.0 / (fan_in ** 0.5)
        w = jax.random.uniform(kw, (fan_out, fan_in), dtype, -bound, bound)
        b = jax.random.uniform(kb, (fan_out,), dtype, -bound, bound)
        return w, b

    k1, k2, k3, k4 = jax.random.split(key, 4)
    w1, b1 = linear(k1, num_params, _HIDDEN)
    w2, b2 = linear(k2, _HIDDEN, _HIDDEN)
    wc, bc = linear(k3, _HIDDEN, 1)
    wr, br = linear(k4, _HIDDEN, num_params)
    return (w1, b1, w2, b2, wc, bc, wr, br)


def prepare_kernel_params(params):
    """Convert PyTorch-layout params to kernel layout.

    Weights: bf16 (documented precision choice), kept as (out_features, in_features).
    Biases:  f32, reshaped to (out_features, 1) for lane-axis broadcast.
    The two heads are fused: rows [0:num_params] = reg head, row [num_params] = class head.
    """
    (w1, b1, w2, b2, wc, bc, wr, br) = params
    wh = jnp.concatenate([wr, wc], axis=0)                  # (num_params+1, 32)
    bh = jnp.concatenate([br, bc], axis=0)                  # (num_params+1,)
    as_w = lambda w: w.astype(jnp.bfloat16)
    as_b = lambda b: b.astype(jnp.float32).reshape(-1, 1)
    return (as_w(w1), as_b(b1), as_w(w2), as_b(b2), as_w(wh), as_b(bh))


def _reference(x, params):
    """Pure-JAX f32 reference matching the PyTorch module."""
    (w1, b1, w2, b2, wc, bc, wr, br) = params
    h = jnp.maximum(x @ w1.T + b1, 0.0)
    h = jnp.maximum(h @ w2.T + b2, 0.0)
    return h @ wc.T + bc, h @ wr.T + br


def _check(batch, num_params, key, **kwargs):
    k_x, k_p = jax.random.split(key)
    x = jax.random.normal(k_x, (batch, num_params), jnp.float32)
    params = init_params(k_p, num_params)
    kparams = prepare_kernel_params(params)

    cls_out, reg_out = noise_classifier_regressor(x, kparams, **kwargs)
    cls_out, reg_out = jax.block_until_ready((cls_out, reg_out))

    cls_ref, reg_ref = _reference(x, params)
    assert cls_out.shape == (batch, 1)
    assert reg_out.shape == (batch, num_params)
    # bf16 matmul operands with f32 accumulation -> compare loosely against f32 ref.
    assert jnp.allclose(cls_out, cls_ref, atol=3e-2, rtol=3e-2)
    assert jnp.allclose(reg_out, reg_ref, atol=3e-2, rtol=3e-2)


if __name__ == "__main__":
    key = jax.random.PRNGKey(0)
    k0, k1, k2 = jax.random.split(key, 3)

    # B=256: two-tile grid (bt=128) -> both v7x TensorCores get work.
    _check(256, 8, k0)
    # B=300: partial trailing tile (bt=256, nb=2) -> exercises Pallas OOB masking.
    _check(300, 8, k1)
    # B=100: single-tile fallback path (bt=B).
    _check(100, 8, k2)

    print("KERNEL_OK")
</pallas_src>

<mosaic_0001>
module attributes {stable_mosaic.version = 11 : i64} {
  func.func @_mlp_kernel(%arg0: i32, %arg1: memref<8x128xbf16, #tpu.memory_space<vmem>>, %arg2: memref<32x8xbf16, #tpu.memory_space<vmem>>, %arg3: memref<32x1xf32, #tpu.memory_space<vmem>>, %arg4: memref<32x32xbf16, #tpu.memory_space<vmem>>, %arg5: memref<32x1xf32, #tpu.memory_space<vmem>>, %arg6: memref<9x32xbf16, #tpu.memory_space<vmem>>, %arg7: memref<9x1xf32, #tpu.memory_space<vmem>>, %arg8: memref<9x128xf32, #tpu.memory_space<vmem>>) attributes {dimension_semantics = [#tpu.dimension_semantics<parallel>], iteration_bounds = array<i64: 2>, scalar_prefetch = 0 : i64, scratch_operands = 0 : i64, tpu.core_type = #tpu.core_type<tc>, window_params = [{transform_indices = @transform_0, window_bounds = array<i64: 8, 128>}, {pipeline_mode = #tpu.pipeline_mode<synchronous>, transform_indices = @transform_1, window_bounds = array<i64: 32, 8>}, {pipeline_mode = #tpu.pipeline_mode<synchronous>, transform_indices = @transform_2, window_bounds = array<i64: 32, 1>}, {pipeline_mode = #tpu.pipeline_mode<synchronous>, transform_indices = @transform_3, window_bounds = array<i64: 32, 32>}, {pipeline_mode = #tpu.pipeline_mode<synchronous>, transform_indices = @transform_4, window_bounds = array<i64: 32, 1>}, {pipeline_mode = #tpu.pipeline_mode<synchronous>, transform_indices = @transform_5, window_bounds = array<i64: 9, 32>}, {pipeline_mode = #tpu.pipeline_mode<synchronous>, transform_indices = @transform_6, window_bounds = array<i64: 9, 1>}, {transform_indices = @transform_7, window_bounds = array<i64: 9, 128>}]} {
    %c0 = arith.constant 0 : index
    %c0_0 = arith.constant 0 : index
    %0 = vector.load %arg1[%c0, %c0_0] : memref<8x128xbf16, #tpu.memory_space<vmem>>, vector<8x128xbf16>
    %c0_1 = arith.constant 0 : index
    %c0_2 = arith.constant 0 : index
    %1 = vector.load %arg2[%c0_1, %c0_2] : memref<32x8xbf16, #tpu.memory_space<vmem>>, vector<32x8xbf16>
    %cst = arith.constant dense<0.000000e+00> : vector<32x128xf32>
    %2 = tpu.matmul %1, %0, %cst {dimension_numbers = #tpu.dot_dimension_numbers<[1], [0], [0], [1], [0, 0, 1, 1], [], []>} : vector<32x8xbf16>, vector<8x128xbf16>, vector<32x128xf32> -> vector<32x128xf32>
    %c0_3 = arith.constant 0 : index
    %c0_4 = arith.constant 0 : index
    %3 = vector.load %arg3[%c0_3, %c0_4] : memref<32x1xf32, #tpu.memory_space<vmem>>, vector<32x1xf32>
    %4 = vector.broadcast %3 : vector<32x1xf32> to vector<32x128xf32>
    %5 = arith.addf %2, %4 : vector<32x128xf32>
    %cst_5 = arith.constant 0.000000e+00 : f32
    %6 = vector.broadcast %cst_5 : f32 to vector<32x128xf32>
    %7 = arith.maximumf %5, %6 : vector<32x128xf32>
    %c0_6 = arith.constant 0 : index
    %c0_7 = arith.constant 0 : index
    %8 = vector.load %arg4[%c0_6, %c0_7] : memref<32x32xbf16, #tpu.memory_space<vmem>>, vector<32x32xbf16>
    %9 = arith.truncf %7 : vector<32x128xf32> to vector<32x128xbf16>
    %cst_8 = arith.constant dense<0.000000e+00> : vector<32x128xf32>
    %10 = tpu.matmul %8, %9, %cst_8 {dimension_numbers = #tpu.dot_dimension_numbers<[1], [0], [0], [1], [0, 0, 1, 1], [], []>} : vector<32x32xbf16>, vector<32x128xbf16>, vector<32x128xf32> -> vector<32x128xf32>
    %c0_9 = arith.constant 0 : index
    %c0_10 = arith.constant 0 : index
    %11 = vector.load %arg5[%c0_9, %c0_10] : memref<32x1xf32, #tpu.memory_space<vmem>>, vector<32x1xf32>
    %12 = vector.broadcast %11 : vector<32x1xf32> to vector<32x128xf32>
    %13 = arith.addf %10, %12 : vector<32x128xf32>
    %cst_11 = arith.constant 0.000000e+00 : f32
    %14 = vector.broadcast %cst_11 : f32 to vector<32x128xf32>
    %15 = arith.maximumf %13, %14 : vector<32x128xf32>
    %c0_12 = arith.constant 0 : index
    %c0_13 = arith.constant 0 : index
    %16 = vector.load %arg6[%c0_12, %c0_13] : memref<9x32xbf16, #tpu.memory_space<vmem>>, vector<9x32xbf16>
    %17 = arith.truncf %15 : vector<32x128xf32> to vector<32x128xbf16>
    %cst_14 = arith.constant dense<0.000000e+00> : vector<9x128xf32>
    %18 = tpu.matmul %16, %17, %cst_14 {dimension_numbers = #tpu.dot_dimension_numbers<[1], [0], [0], [1], [0, 0, 1, 1], [], []>} : vector<9x32xbf16>, vector<32x128xbf16>, vector<9x128xf32> -> vector<9x128xf32>
    %c0_15 = arith.constant 0 : index
    %c0_16 = arith.constant 0 : index
    %19 = vector.load %arg7[%c0_15, %c0_16] : memref<9x1xf32, #tpu.memory_space<vmem>>, vector<9x1xf32>
    %20 = vector.broadcast %19 : vector<9x1xf32> to vector<9x128xf32>
    %21 = arith.addf %18, %20 : vector<9x128xf32>
    %c0_17 = arith.constant 0 : index
    %c0_18 = arith.constant 0 : index
    %22 = vector.load %arg8[%c0_17, %c0_18] : memref<9x128xf32, #tpu.memory_space<vmem>>, vector<9x128xf32>
    tpu.vector_store %arg8[%c0_17, %c0_18], %21 {strides = array<i32>} : memref<9x128xf32, #tpu.memory_space<vmem>>, vector<9x128xf32>,
    return
  }
  func.func @transform_0(%arg0: i32) -> (i32, i32) {
    %c0_i32 = arith.constant 0 : i32
    %c0_i32_0 = arith.constant 0 : i32
    return %c0_i32, %arg0 : i32, i32
  }
  func.func @transform_1(%arg0: i32) -> (i32, i32) {
    %c0_i32 = arith.constant 0 : i32
    %c0_i32_0 = arith.constant 0 : i32
    %c0_i32_1 = arith.constant 0 : i32
    return %c0_i32, %c0_i32_0 : i32, i32
  }
  func.func @transform_2(%arg0: i32) -> (i32, i32) {
    %c0_i32 = arith.constant 0 : i32
    %c0_i32_0 = arith.constant 0 : i32
    %c0_i32_1 = arith.constant 0 : i32
    return %c0_i32, %c0_i32_0 : i32, i32
  }
  func.func @transform_3(%arg0: i32) -> (i32, i32) {
    %c0_i32 = arith.constant 0 : i32
    %c0_i32_0 = arith.constant 0 : i32
    %c0_i32_1 = arith.constant 0 : i32
    return %c0_i32, %c0_i32_0 : i32, i32
  }
  func.func @transform_4(%arg0: i32) -> (i32, i32) {
    %c0_i32 = arith.constant 0 : i32
    %c0_i32_0 = arith.constant 0 : i32
    %c0_i32_1 = arith.constant 0 : i32
    return %c0_i32, %c0_i32_0 : i32, i32
  }
  func.func @transform_5(%arg0: i32) -> (i32, i32) {
    %c0_i32 = arith.constant 0 : i32
    %c0_i32_0 = arith.constant 0 : i32
    %c0_i32_1 = arith.constant 0 : i32
    return %c0_i32, %c0_i32_0 : i32, i32
  }
  func.func @transform_6(%arg0: i32) -> (i32, i32) {
    %c0_i32 = arith.constant 0 : i32
    %c0_i32_0 = arith.constant 0 : i32
    %c0_i32_1 = arith.constant 0 : i32
    return %c0_i32, %c0_i32_0 : i32, i32
  }
  func.func @transform_7(%arg0: i32) -> (i32, i32) {
    %c0_i32 = arith.constant 0 : i32
    %c0_i32_0 = arith.constant 0 : i32
    return %c0_i32, %arg0 : i32, i32
  }
}

</mosaic_0001>

<llo_original>
// kernel: tpu_custom_call.1
$region0: #{tpu_custom_call.1}
  #allocation0 [shape = 'u32[]', space=smem, size = 0x4, offset = 0x4, fixed_abs, tag = 'smem constant byte address 0x4 - core index']
  #allocation1 [shape = 'u32[144,128]{1,0:T(1,128)}', space=vmem, size = 0x12000, scoped, tag = 'internal scratch']
  %s0 = inlined_call_operand.vmem [shape: bf16[8,256], index: 0, kind: input, shape index: {}]
  %s1 = inlined_call_operand.vmem [shape: bf16[32,8], index: 1, kind: input, shape index: {}]
  %s2 = inlined_call_operand.vmem [shape: f32[32,1], index: 2, kind: input, shape index: {}]
  %s3 = inlined_call_operand.vmem [shape: bf16[32,32], index: 3, kind: input, shape index: {}]
  %s4 = inlined_call_operand.vmem [shape: f32[32,1], index: 4, kind: input, shape index: {}]
  %s5 = inlined_call_operand.vmem [shape: bf16[9,32], index: 5, kind: input, shape index: {}]
  %s6 = inlined_call_operand.vmem [shape: f32[9,1], index: 6, kind: input, shape index: {}]
  %s7 = inlined_call_operand.hbm [shape: f32[9,256], index: 7, kind: output, shape index: {}]
  %s8 = sld [smem:[#allocation0]]
  $region61: #{tpu_custom_call.1} parent=0
    _
  %s10 = ssub.s32 1, %s8
  %s11 = scalar_select 0, %s10, %s8
  $region1: #{tpu_custom_call.1} parent=0
    #allocation2 [shape = 'u8[16384]{0}', space=vmem, size = 0x4000, scoped, tag = 'output window, operand 0']
    #allocation3 [shape = 's32[2]{0}', space=sflag, size = 0x8, scoped, tag = 'scoped memory for tpu_custom_call.1']
    %12 = vsyncpa [#allocation3], 0
    %s13 = scalar_lea.sflag [#allocation3], 1
    %14 = vsyncpa %s13, 0
    loop: start=0, step=1, limit=4
    $region2: #{tpu_custom_call.1} parent=1 // loop_pre_header
      _
    $region3: #{tpu_custom_call.1} parent=1 // loop_header
      %s16 = sphi 0, %s20
      %p17 = scmp.ge.s32.totalorder %s16, 4
      %s26 = sphi 0, %s28
      %s29 = sphi 0, %s26
      %s30 = sphi 0, %s29
      %s46 = sphi 0, %s30
      %s50 = sphi 0, %s50
      %s52 = sphi 0, %s50
      %s53 = sphi 0, %s52
      %s67 = sphi 0, %s53
      %s71 = sphi 0, %s71
      %s73 = sphi 0, %s71
      %s74 = sphi 0, %s73
      %s88 = sphi 0, %s74
      %s92 = sphi 0, %s92
      %s94 = sphi 0, %s92
      %s95 = sphi 0, %s94
      %s109 = sphi 0, %s95
      %s113 = sphi 0, %s113
      %s115 = sphi 0, %s113
      %s116 = sphi 0, %s115
      %s130 = sphi 0, %s116
      %s134 = sphi 0, %s134
      %s136 = sphi 0, %s134
      %s137 = sphi 0, %s136
      %s151 = sphi 0, %s137
      %s155 = sphi 0, %s155
      %s157 = sphi 0, %s155
      %s158 = sphi 0, %s157
      %s172 = sphi 0, %s158
      %s178 = sphi 0, %s180
      %s181 = sphi 0, %s178
      %s182 = sphi 0, %s181
      %s198 = sphi 0, %s182
    $region4: #{tpu_custom_call.1} parent=1 // loop_header_branch
      %19 = sbr.rel (%p17) target = $region8
    $region5: #{tpu_custom_call.1} parent=1 // loop_body
      %s21 = ssub.s32 %s16, 1
      %s22 = ssub.s32 %s16, 2
      %s23 = sadd.s32 %s16, 1
      %s24 = ssub.s32 %s16, %s23
      %p25 = scmp.eq.s32.totalorder %s24, 0
      %s27 = sadd.s32 %s26, 1
      %s28 = scalar_select %p25, %s26, %s27
      %p31 = pneg %p25
      %p32 = scmp.eq.s32.totalorder %s16, 1
      %p33 = por %p31, %p32
      %p34 = scmp.ne.s32.totalorder %s26, %s29
      %p35 = scmp.eq.s32.totalorder %s16, 0
      %p36 = por %p34, %p35
      %p37 = scmp.ne.s32.totalorder %s26, %s29
      %p38 = scmp.eq.s32.totalorder %s21, 1
      %p39 = por %p37, %p38
      %p40 = scmp.ne.s32.totalorder %s29, %s30
      %p41 = scmp.eq.s32.totalorder %s21, 0
      %p42 = por %p40, %p41
      %p43 = scmp.ne.s32.totalorder %s29, %s30
      %p44 = scmp.eq.s32.totalorder %s22, 1
      %p45 = por %p43, %p44
      %p47 = scmp.ne.s32.totalorder %s30, %s46
      %p48 = scmp.eq.s32.totalorder %s22, 0
      %p49 = por %p47, %p48
      %s51 = sadd.s32 %s50, 1
      %p54 = scmp.eq.s32.totalorder %s16, 1
      %p55 = scmp.ne.s32.totalorder %s50, %s52
      %p56 = scmp.eq.s32.totalorder %s16, 0
      %p57 = por %p55, %p56
      %p58 = scmp.ne.s32.totalorder %s50, %s52
      %p59 = scmp.eq.s32.totalorder %s21, 1
      %p60 = por %p58, %p59
      %p61 = scmp.ne.s32.totalorder %s52, %s53
      %p62 = scmp.eq.s32.totalorder %s21, 0
      %p63 = por %p61, %p62
      %p64 = scmp.ne.s32.totalorder %s52, %s53
      %p65 = scmp.eq.s32.totalorder %s22, 1
      %p66 = por %p64, %p65
      %p68 = scmp.ne.s32.totalorder %s53, %s67
      %p69 = scmp.eq.s32.totalorder %s22, 0
      %p70 = por %p68, %p69
      %s72 = sadd.s32 %s71, 1
      %p75 = scmp.eq.s32.totalorder %s16, 1
      %p76 = scmp.ne.s32.totalorder %s71, %s73
      %p77 = scmp.eq.s32.totalorder %s16, 0
      %p78 = por %p76, %p77
      %p79 = scmp.ne.s32.totalorder %s71, %s73
      %p80 = scmp.eq.s32.totalorder %s21, 1
      %p81 = por %p79, %p80
      %p82 = scmp.ne.s32.totalorder %s73, %s74
      %p83 = scmp.eq.s32.totalorder %s21, 0
      %p84 = por %p82, %p83
      %p85 = scmp.ne.s32.totalorder %s73, %s74
      %p86 = scmp.eq.s32.totalorder %s22, 1
      %p87 = por %p85, %p86
      %p89 = scmp.ne.s32.totalorder %s74, %s88
      %p90 = scmp.eq.s32.totalorder %s22, 0
      %p91 = por %p89, %p90
      %s93 = sadd.s32 %s92, 1
      %p96 = scmp.eq.s32.totalorder %s16, 1
      %p97 = scmp.ne.s32.totalorder %s92, %s94
      %p98 = scmp.eq.s32.totalorder %s16, 0
      %p99 = por %p97, %p98
      %p100 = scmp.ne.s32.totalorder %s92, %s94
      %p101 = scmp.eq.s32.totalorder %s21, 1
      %p102 = por %p100, %p101
      %p103 = scmp.ne.s32.totalorder %s94, %s95
      %p104 = scmp.eq.s32.totalorder %s21, 0
      %p105 = por %p103, %p104
      %p106 = scmp.ne.s32.totalorder %s94, %s95
      %p107 = scmp.eq.s32.totalorder %s22, 1
      %p108 = por %p106, %p107
      %p110 = scmp.ne.s32.totalorder %s95, %s109
      %p111 = scmp.eq.s32.totalorder %s22, 0
      %p112 = por %p110, %p111
      %s114 = sadd.s32 %s113, 1
      %p117 = scmp.eq.s32.totalorder %s16, 1
      %p118 = scmp.ne.s32.totalorder %s113, %s115
      %p119 = scmp.eq.s32.totalorder %s16, 0
      %p120 = por %p118, %p119
      %p121 = scmp.ne.s32.totalorder %s113, %s115
      %p122 = scmp.eq.s32.totalorder %s21, 1
      %p123 = por %p121, %p122
      %p124 = scmp.ne.s32.totalorder %s115, %s116
      %p125 = scmp.eq.s32.totalorder %s21, 0
      %p126 = por %p124, %p125
      %p127 = scmp.ne.s32.totalorder %s115, %s116
      %p128 = scmp.eq.s32.totalorder %s22, 1
      %p129 = por %p127, %p128
      %p131 = scmp.ne.s32.totalorder %s116, %s130
      %p132 = scmp.eq.s32.totalorder %s22, 0
      %p133 = por %p131, %p132
      %s135 = sadd.s32 %s134, 1
      %p138 = scmp.eq.s32.totalorder %s16, 1
      %p139 = scmp.ne.s32.totalorder %s134, %s136
      %p140 = scmp.eq.s32.totalorder %s16, 0
      %p141 = por %p139, %p140
      %p142 = scmp.ne.s32.totalorder %s134, %s136
      %p143 = scmp.eq.s32.totalorder %s21, 1
      %p144 = por %p142, %p143
      %p145 = scmp.ne.s32.totalorder %s136, %s137
      %p146 = scmp.eq.s32.totalorder %s21, 0
      %p147 = por %p145, %p146
      %p148 = scmp.ne.s32.totalorder %s136, %s137
      %p149 = scmp.eq.s32.totalorder %s22, 1
      %p150 = por %p148, %p149
      %p152 = scmp.ne.s32.totalorder %s137, %s151
      %p153 = scmp.eq.s32.totalorder %s22, 0
      %p154 = por %p152, %p153
      %s156 = sadd.s32 %s155, 1
      %p159 = scmp.eq.s32.totalorder %s16, 1
      %p160 = scmp.ne.s32.totalorder %s155, %s157
      %p161 = scmp.eq.s32.totalorder %s16, 0
      %p162 = por %p160, %p161
      %p163 = scmp.ne.s32.totalorder %s155, %s157
      %p164 = scmp.eq.s32.totalorder %s21, 1
      %p165 = por %p163, %p164
      %p166 = scmp.ne.s32.totalorder %s157, %s158
      %p167 = scmp.eq.s32.totalorder %s21, 0
      %p168 = por %p166, %p167
      %p169 = scmp.ne.s32.totalorder %s157, %s158
      %p170 = scmp.eq.s32.totalorder %s22, 1
      %p171 = por %p169, %p170
      %p173 = scmp.ne.s32.totalorder %s158, %s172
      %p174 = scmp.eq.s32.totalorder %s22, 0
      %p175 = por %p173, %p174
      %s176 = ssub.s32 %s16, %s23
      %p177 = scmp.eq.s32.totalorder %s176, 0
      %s179 = sadd.s32 %s178, 1
      %s180 = scalar_select %p177, %s178, %s179
      %p183 = pneg %p177
      %p184 = scmp.eq.s32.totalorder %s16, 1
      %p185 = por %p183, %p184
      %p186 = scmp.ne.s32.totalorder %s178, %s181
      %p187 = scmp.eq.s32.totalorder %s16, 0
      %p188 = por %p186, %p187
      %p189 = scmp.ne.s32.totalorder %s178, %s181
      %p190 = scmp.eq.s32.totalorder %s21, 1
      %p191 = por %p189, %p190
      %p192 = scmp.ne.s32.totalorder %s181, %s182
      %p193 = scmp.eq.s32.totalorder %s21, 0
      %p194 = por %p192, %p193
      %p195 = scmp.ne.s32.totalorder %s181, %s182
      %p196 = scmp.eq.s32.totalorder %s22, 1
      %p197 = por %p195, %p196
      %p199 = scmp.ne.s32.totalorder %s182, %s198
      %p200 = scmp.eq.s32.totalorder %s22, 0
      %p201 = por %p199, %p200
      %p202 = scmp.le.s32.totalorder 1, %s16
      %p203 = scmp.lt.s32.totalorder %s16, 3
      %p204 = pnand %p202, %p203
      %p205 = pneg %p204
      // Predicated region
      $region9: #{tpu_custom_call.1} parent=5 // pred_check
        _
      $region10: #{tpu_custom_call.1} parent=5 // pred_check_branch
        %207 = sbr.rel (%p204) target = $region12
      $region11: #{tpu_custom_call.1} parent=5 // pred_region
        %s208 = ssub.s32 %s16, 1
        // Predicated region
        $region13: #{tpu_custom_call.1} parent=11 // pred_check
          %p209 = pneg %p63
        $region14: #{tpu_custom_call.1} parent=11 // pred_check_branch
          %211 = sbr.rel (%p209) target = $region16
        $region15: #{tpu_custom_call.1} parent=11 // pred_region
          _
        $region16: #{tpu_custom_call.1} parent=11 // pred_fallthru
          _
        // Predicated region
        $region17: #{tpu_custom_call.1} parent=11 // pred_check
          %p212 = pneg %p84
        $region18: #{tpu_custom_call.1} parent=11 // pred_check_branch
          %214 = sbr.rel (%p212) target = $region20
        $region19: #{tpu_custom_call.1} parent=11 // pred_region
          _
        $region20: #{tpu_custom_call.1} parent=11 // pred_fallthru
          _
        // Predicated region
        $region21: #{tpu_custom_call.1} parent=11 // pred_check
          %p215 = pneg %p105
        $region22: #{tpu_custom_call.1} parent=11 // pred_check_branch
          %217 = sbr.rel (%p215) target = $region24
        $region23: #{tpu_custom_call.1} parent=11 // pred_region
          _
        $region24: #{tpu_custom_call.1} parent=11 // pred_fallthru
          _
        // Predicated region
        $region25: #{tpu_custom_call.1} parent=11 // pred_check
          %p218 = pneg %p126
        $region26: #{tpu_custom_call.1} parent=11 // pred_check_branch
          %220 = sbr.rel (%p218) target = $region28
        $region27: #{tpu_custom_call.1} parent=11 // pred_region
          _
        $region28: #{tpu_custom_call.1} parent=11 // pred_fallthru
          _
        // Predicated region
        $region29: #{tpu_custom_call.1} parent=11 // pred_check
          %p221 = pneg %p147
        $region30: #{tpu_custom_call.1} parent=11 // pred_check_branch
          %223 = sbr.rel (%p221) target = $region32
        $region31: #{tpu_custom_call.1} parent=11 // pred_region
          _
        $region32: #{tpu_custom_call.1} parent=11 // pred_fallthru
          _
        // Predicated region
        $region33: #{tpu_custom_call.1} parent=11 // pred_check
          %p224 = pneg %p168
        $region34: #{tpu_custom_call.1} parent=11 // pred_check_branch
          %226 = sbr.rel (%p224) target = $region36
        $region35: #{tpu_custom_call.1} parent=11 // pred_region
          _
        $region36: #{tpu_custom_call.1} parent=11 // pred_fallthru
          _
      $region12: #{tpu_custom_call.1} parent=5 // pred_fallthru
        _
      %p227 = scmp.lt.s32.totalorder %s16, 2
      // Predicated region
      $region37: #{tpu_custom_call.1} parent=5 // pred_check
        %p228 = pneg %p227
      $region38: #{tpu_custom_call.1} parent=5 // pred_check_branch
        %230 = sbr.rel (%p228) target = $region40
      $region39: #{tpu_custom_call.1} parent=5 // pred_region
        // Predicated region
        $region41: #{tpu_custom_call.1} parent=39 // pred_check
          %p231 = pneg %p36
        $region42: #{tpu_custom_call.1} parent=39 // pred_check_branch
          %233 = sbr.rel (%p231) target = $region44
        $region43: #{tpu_custom_call.1} parent=39 // pred_region
          %p234 = scmp.lt.s32.totalorder %s16, 1
          %s235 = scalar_select %p234, %s16, 1
          %s236 = smul.addr %s235, 4
          %s237 = scalar_lea.vmem %s0, %s236
        $region44: #{tpu_custom_call.1} parent=39 // pred_fallthru
          _
      $region40: #{tpu_custom_call.1} parent=5 // pred_fallthru
        _
      %p238 = scmp.le.s32.totalorder 1, %s16
      %p239 = scmp.lt.s32.totalorder %s16, 3
      %p240 = pnand %p238, %p239
      %p241 = pneg %p240
      // Predicated region
      $region45: #{tpu_custom_call.1} parent=5 // pred_check
        _
      $region46: #{tpu_custom_call.1} parent=5 // pred_check_branch
        %243 = sbr.rel (%p240) target = $region48
      $region47: #{tpu_custom_call.1} parent=5 // pred_region
        %s244 = ssub.s32 %s16, 1
        %p245 = scmp.lt.s32.totalorder %s21, 1
        %s246 = scalar_select %p245, %s21, 1
        %s247 = smul.addr %s246, 4
        %s248 = scalar_lea.vmem %s0, %s247
        %p249 = pneg %p42
        %p250 = pneg %p39
        %p251 = pneg %p63
        %p252 = pneg %p60
        %p253 = pneg %p84
        %p254 = pneg %p81
        %p255 = pneg %p105
        %p256 = pneg %p102
        %p257 = pneg %p126
        %p258 = pneg %p123
        %p259 = pneg %p147
        %p260 = pneg %p144
        %p261 = pneg %p168
        %p262 = pneg %p165
        %p263 = pneg %p194
        %p264 = pneg %p191
        %s265 = sand.u32 %s181, 1
        %s266 = scalar_lea.sflag [#allocation3], %s265
        %s267 = sand.u32 %s181, 1
        %s268 = smul.addr %s267, 16
        %s269 = scalar_lea.vmem [#allocation2], %s268
        %p270 = scmp.lt.s32.totalorder %s21, 1
        %s271 = scalar_select %p270, %s21, 1
        %s272 = smul.addr %s271, 4
        %s273 = scalar_lea.vmem %s0, %s272
        %v275 = vld [vmem:[%s273] sm:$0xf]
        %v276 = vld [vmem:[%s1] sm:$0xf]
        %v277 = vld [vmem:[%s1 + $0x4] sm:$0xf]
        %v278 = vld [vmem:[%s1 + $0x8] sm:$0xf]
        %v279 = vld [vmem:[%s1 + $0xc] sm:$0xf]
        %v280 = vld [vmem:[%s2] sm:$0xff]
        %v281 = vld [vmem:[%s2 + $0x8] sm:$0xff]
        %v282 = vld [vmem:[%s2 + $0x10] sm:$0xff]
        %v283 = vld [vmem:[%s2 + $0x18] sm:$0xff]
        %285 = vset.pattern.permute.xlu0 0
        %286 = vperm.xlu0 %285, %v280
        %v287 = vpop.permute.xlu0 %286
        %290 = vset.pattern.permute.xlu0 0
        %291 = vperm.xlu0 %290, %v281
        %v292 = vpop.permute.xlu0 %291
        %295 = vset.pattern.permute.xlu0 0
        %296 = vperm.xlu0 %295, %v282
        %v297 = vpop.permute.xlu0 %296
        %300 = vset.pattern.permute.xlu0 0
        %301 = vperm.xlu0 %300, %v283
        %v302 = vpop.permute.xlu0 %301
        %v308 = vunpack.c.l.b16 %v276
        %v309 = vunpack.c.l.b16 %v277
        %v310 = vunpack.c.l.b16 %v278
        %v311 = vunpack.c.l.b16 %v279
        %v312 = vpack.c.b16 %v309, %v308
        %v313 = vpack.c.b16 %v311, %v310
        %vm314 = vcmask 64512
        %v316 = vsel %vm314, %v312, 0
        %v319 = vsel %vm314, %v313, 0
        %vm321 = vcmask 1043456
        %v323 = vsel %vm321, %v275, 0
        %325 = vmatprep.subr.bf16.mxu0 0
        %326 = vmatpush1.bf16.msra.mxu0 %v323
        %327 = vmatprep.subr.bf16.mxu0 0
        %328 = vmatpush1.bf16.msra.mxu0 0
        %329 = vmatprep.subr.bf16.mxu0 0
        %330 = vmatpush1.bf16.msra.mxu0 0
        %331 = vmatprep.subr.bf16.mxu0 0
        %332 = vmatpush1.bf16.msra.mxu0 0
        %333 = vmatprep.subr.bf16.mxu0 0
        %334 = vmatpush1.bf16.msra.mxu0 0
        %335 = vmatprep.subr.bf16.mxu0 0
        %336 = vmatpush1.bf16.msra.mxu0 0
        %337 = vmatprep.subr.bf16.mxu0 0
        %338 = vmatpush1.bf16.msra.mxu0 0
        %339 = vmatprep.subr.bf16.mxu0 0
        %340 = vmatpush1.bf16.msra.mxu0 0
        %341 = vmatprep.subr.bf16.mxu0 0
        %342 = vmatpush1.bf16.msra.mxu0 0
        %343 = vmatprep.subr.bf16.mxu0 0
        %344 = vmatpush1.bf16.msra.mxu0 0
        %345 = vmatprep.subr.bf16.mxu0 0
        %346 = vmatpush1.bf16.msra.mxu0 0
        %347 = vmatprep.subr.bf16.mxu0 0
        %348 = vmatpush1.bf16.msra.mxu0 0
        %349 = vmatprep.subr.bf16.mxu0 0
        %350 = vmatpush1.bf16.msra.mxu0 0
        %351 = vmatprep.subr.bf16.mxu0 0
        %352 = vmatpush1.bf16.msra.mxu0 0
        %353 = vmatprep.subr.bf16.mxu0 0
        %354 = vmatpush1.bf16.msra.mxu0 0
        %355 = vmatprep.subr.bf16.mxu0 0
        %356 = vmatpush1.bf16.msra.mxu0 0
        %357 = vmatprep.mubr.bf16.mxu0 0
        %358 = vmatmul.mubr.bf16.gmra.mrb[0].mxu0 %v316
        %v359 = vpop.f32.mrb[0].mxu0
        %v360 = vadd.f32 %v287, %v359
        %v361 = vpop.f32.mrb[0].mxu0
        %v362 = vpop.f32.mrb[0].mxu0
        %v363 = vadd.f32 %v292, %v362
        %v364 = vpop.f32.mrb[0].mxu0
        %365 = vmatprep.mubr.bf16.mxu0 0
        %366 = vmatmul.mubr.bf16.gmra.mrb[0].mxu0 %v319
        %v367 = vpop.f32.mrb[0].mxu0
        %v368 = vadd.f32 %v297, %v367
        %v369 = vpop.f32.mrb[0].mxu0
        %v370 = vpop.f32.mrb[0].mxu0
        %v371 = vadd.f32 %v302, %v370
        %v372 = vpop.f32.mrb[0].mxu0
        %373 = vdwg.mxu0
        %v374 = vmax.f32 %v360, 0.0
        %v375 = vmax.f32 %v363, 0.0
        %v376 = vmax.f32 %v368, 0.0
        %v377 = vmax.f32 %v371, 0.0
        %v378 = vld [vmem:[%s3] sm:$0xf]
        %v379 = vld [vmem:[%s3 + $0x4] sm:$0xf]
        %v380 = vld [vmem:[%s3 + $0x8] sm:$0xf]
        %v381 = vld [vmem:[%s3 + $0xc] sm:$0xf]
        %v382 = vpack.c.bf16 %v375, %v374
        %v383 = vpack.c.bf16 %v377, %v376
        %v384 = vld [vmem:[%s4] sm:$0xff]
        %v385 = vld [vmem:[%s4 + $0x8] sm:$0xff]
        %v386 = vld [vmem:[%s4 + $0x10] sm:$0xff]
        %v387 = vld [vmem:[%s4 + $0x18] sm:$0xff]
        %389 = vset.pattern.permute.xlu0 0
        %390 = vperm.xlu0 %389, %v384
        %v391 = vpop.permute.xlu0 %390
        %394 = vset.pattern.permute.xlu0 0
        %395 = vperm.xlu0 %394, %v385
        %v396 = vpop.permute.xlu0 %395
        %399 = vset.pattern.permute.xlu0 0
        %400 = vperm.xlu0 %399, %v386
        %v401 = vpop.permute.xlu0 %400
        %404 = vset.pattern.permute.xlu0 0
        %405 = vperm.xlu0 %404, %v387
        %v406 = vpop.permute.xlu0 %405
        %v412 = vunpack.c.l.b16 %v378
        %v413 = vunpack.c.l.b16 %v379
        %v414 = vunpack.c.l.b16 %v380
        %v415 = vunpack.c.l.b16 %v381
        %v416 = vpack.c.b16 %v413, %v412
        %v417 = vpack.c.b16 %v415, %v414
        %vm418 = vcmask 261120
        %v420 = vsel %vm418, %v416, 0
        %v423 = vsel %vm418, %v417, 0
        %425 = vmatprep.subr.bf16.mxu0 0
        %426 = vmatpush1.bf16.msra.mxu0 %v382
        %427 = vmatprep.subr.bf16.mxu0 0
        %428 = vmatpush1.bf16.msra.mxu0 %v383
        %429 = vmatprep.subr.bf16.mxu0 0
        %430 = vmatpush1.bf16.msra.mxu0 0
        %431 = vmatprep.subr.bf16.mxu0 0
        %432 = vmatpush1.bf16.msra.mxu0 0
        %433 = vmatprep.subr.bf16.mxu0 0
        %434 = vmatpush1.bf16.msra.mxu0 0
        %435 = vmatprep.subr.bf16.mxu0 0
        %436 = vmatpush1.bf16.msra.mxu0 0
        %437 = vmatprep.subr.bf16.mxu0 0
        %438 = vmatpush1.bf16.msra.mxu0 0
        %439 = vmatprep.subr.bf16.mxu0 0
        %440 = vmatpush1.bf16.msra.mxu0 0
        %441 = vmatprep.subr.bf16.mxu0 0
        %442 = vmatpush1.bf16.msra.mxu0 0
        %443 = vmatprep.subr.bf16.mxu0 0
        %444 = vmatpush1.bf16.msra.mxu0 0
        %445 = vmatprep.subr.bf16.mxu0 0
        %446 = vmatpush1.bf16.msra.mxu0 0
        %447 = vmatprep.subr.bf16.mxu0 0
        %448 = vmatpush1.bf16.msra.mxu0 0
        %449 = vmatprep.subr.bf16.mxu0 0
        %450 = vmatpush1.bf16.msra.mxu0 0
        %451 = vmatprep.subr.bf16.mxu0 0
        %452 = vmatpush1.bf16.msra.mxu0 0
        %453 = vmatprep.subr.bf16.mxu0 0
        %454 = vmatpush1.bf16.msra.mxu0 0
        %455 = vmatprep.subr.bf16.mxu0 0
        %456 = vmatpush1.bf16.msra.mxu0 0
        %457 = vmatprep.mubr.bf16.mxu0 0
        %458 = vmatmul.mubr.bf16.gmra.mrb[0].mxu0 %v420
        %v459 = vpop.f32.mrb[0].mxu0
        %v460 = vadd.f32 %v391, %v459
        %v461 = vpop.f32.mrb[0].mxu0
        %v462 = vpop.f32.mrb[0].mxu0
        %v463 = vadd.f32 %v396, %v462
        %v464 = vpop.f32.mrb[0].mxu0
        %465 = vmatprep.mubr.bf16.mxu0 0
        %466 = vmatmul.mubr.bf16.gmra.mrb[0].mxu0 %v423
        %v467 = vpop.f32.mrb[0].mxu0
        %v468 = vadd.f32 %v401, %v467
        %v469 = vpop.f32.mrb[0].mxu0
        %v470 = vpop.f32.mrb[0].mxu0
        %v471 = vadd.f32 %v406, %v470
        %v472 = vpop.f32.mrb[0].mxu0
        %473 = vdwg.mxu0
        %v474 = vmax.f32 %v460, 0.0
        %v475 = vmax.f32 %v463, 0.0
        %v476 = vmax.f32 %v468, 0.0
        %v477 = vmax.f32 %v471, 0.0
        %v478 = vld [vmem:[%s5] sm:$0xf]
        %v479 = vld [vmem:[%s5 + $0x4] sm:$0x1]
        %v480 = vpack.c.bf16 %v475, %v474
        %v481 = vpack.c.bf16 %v477, %v476
        %v482 = vld [vmem:[%s6] sm:$0xff]
        %v483 = vld [vmem:[%s6 + $0x8] sm:$0x1]
        %485 = vset.pattern.permute.xlu0 0
        %486 = vperm.xlu0 %485, %v482
        %v487 = vpop.permute.xlu0 %486
        %490 = vset.pattern.permute.xlu0 0
        %491 = vperm.xlu0 %490, %v483
        %v492 = vpop.permute.xlu0 %491
        %v496 = vunpack.c.l.b16 %v478
        %v497 = vunpack.c.l.b16 %v479
        %v498 = vpack.c.b16 %v497, %v496
        %v500 = vsel %vm418, %v498, 0
        %502 = vmatprep.subr.bf16.mxu0 0
        %503 = vmatpush1.bf16.msra.mxu0 %v480
        %504 = vmatprep.subr.bf16.mxu0 0
        %505 = vmatpush1.bf16.msra.mxu0 %v481
        %506 = vmatprep.subr.bf16.mxu0 0
        %507 = vmatpush1.bf16.msra.mxu0 0
        %508 = vmatprep.subr.bf16.mxu0 0
        %509 = vmatpush1.bf16.msra.mxu0 0
        %510 = vmatprep.subr.bf16.mxu0 0
        %511 = vmatpush1.bf16.msra.mxu0 0
        %512 = vmatprep.subr.bf16.mxu0 0
        %513 = vmatpush1.bf16.msra.mxu0 0
        %514 = vmatprep.subr.bf16.mxu0 0
        %515 = vmatpush1.bf16.msra.mxu0 0
        %516 = vmatprep.subr.bf16.mxu0 0
        %517 = vmatpush1.bf16.msra.mxu0 0
        %518 = vmatprep.subr.bf16.mxu0 0
        %519 = vmatpush1.bf16.msra.mxu0 0
        %520 = vmatprep.subr.bf16.mxu0 0
        %521 = vmatpush1.bf16.msra.mxu0 0
        %522 = vmatprep.subr.bf16.mxu0 0
        %523 = vmatpush1.bf16.msra.mxu0 0
        %524 = vmatprep.subr.bf16.mxu0 0
        %525 = vmatpush1.bf16.msra.mxu0 0
        %526 = vmatprep.subr.bf16.mxu0 0
        %527 = vmatpush1.bf16.msra.mxu0 0
        %528 = vmatprep.subr.bf16.mxu0 0
        %529 = vmatpush1.bf16.msra.mxu0 0
        %530 = vmatprep.subr.bf16.mxu0 0
        %531 = vmatpush1.bf16.msra.mxu0 0
        %532 = vmatprep.subr.bf16.mxu0 0
        %533 = vmatpush1.bf16.msra.mxu0 0
        %534 = vmatprep.mubr.bf16.mxu0 0
        %535 = vmatmul.mubr.bf16.gmra.mrb[0].mxu0 %v500
        %v536 = vpop.f32.mrb[0].mxu0
        %v537 = vadd.f32 %v487, %v536
        %v538 = vpop.f32.mrb[0].mxu0
        %v539 = vpop.f32.mrb[0].mxu0
        %v540 = vadd.f32 %v492, %v539
        %v541 = vpop.f32.mrb[0].mxu0
        %542 = vdwg.mxu0
        %543 = vst [vmem:[%s269] sm:$0xff] %v537
        %544 = vst [vmem:[%s269 + $0x8] sm:$0x1] %v540
        %s545 = sand.u32 %s181, 1
        %s546 = scalar_lea.sflag [#allocation3], %s545
        %s547 = sand.u32 %s181, 1
        %s548 = smul.addr %s547, 16
        %s549 = scalar_lea.vmem [#allocation2], %s548
        // Predicated region
        $region49: #{tpu_custom_call.1} parent=47 // pred_check
          %p550 = pneg %p191
        $region50: #{tpu_custom_call.1} parent=47 // pred_check_branch
          %552 = sbr.rel (%p550) target = $region52
        $region51: #{tpu_custom_call.1} parent=47 // pred_region
          %s554 = ssub.s32 256, 256
          %555 = vsyncadd %s546, %s554
          %s556 = smul.addr %s21, 128
          %s557 = scalar_lea.hbm %s7, %s556
          %s558 = sshll.u32 %s549, 4
          %s559 = int_to_ptr.vmem [resolvable:$true] %s558
          %564 = dma.vmem_to_hbm [thread:$0]  %s559, 256, %s557, %s546, 128, 256, 8
        $region52: #{tpu_custom_call.1} parent=47 // pred_fallthru
          _
      $region48: #{tpu_custom_call.1} parent=5 // pred_fallthru
        _
      %p565 = scmp.le.s32.totalorder 2, %s16
      // Predicated region
      $region53: #{tpu_custom_call.1} parent=5 // pred_check
        %p566 = pneg %p565
      $region54: #{tpu_custom_call.1} parent=5 // pred_check_branch
        %568 = sbr.rel (%p566) target = $region56
      $region55: #{tpu_custom_call.1} parent=5 // pred_region
        %s569 = ssub.s32 %s16, 2
        // Predicated region
        $region57: #{tpu_custom_call.1} parent=55 // pred_check
          %p570 = pneg %p197
        $region58: #{tpu_custom_call.1} parent=55 // pred_check_branch
          %572 = sbr.rel (%p570) target = $region60
        $region59: #{tpu_custom_call.1} parent=55 // pred_region
          %s573 = sand.u32 %s182, 1
          %s574 = scalar_lea.sflag [#allocation3], %s573
          %s575 = sand.u32 %s182, 1
          %s576 = smul.addr %s575, 16
          %s577 = scalar_lea.vmem [#allocation2], %s576
          %578 = dma.done %s574, 256
        $region60: #{tpu_custom_call.1} parent=55 // pred_fallthru
          _
      $region56: #{tpu_custom_call.1} parent=5 // pred_fallthru
        _
    $region6: #{tpu_custom_call.1} parent=1 // loop_footer
      %s20 = sadd.s32 1, %s16
    $region7: #{tpu_custom_call.1} parent=1 // loop_footer_branch
      %15 = sbr.rel target = $region3
    $region8: #{tpu_custom_call.1} parent=1 // loop_exit
      _
    %579 = vsyncpa [#allocation3], 1
    %s580 = scalar_lea.sflag [#allocation3], 1
    %581 = vsyncpa %s580, 1

</llo_original>
